<compile_context>
chip_gen: v5e
topology: v5e:2x2
jax: 0.10.0
libtpu: 0.0.40
codegen_flags: <defaults>
</compile_context>

<pallas_src>
import math
import jax
import jax.numpy as jnp
from jax.experimental import pallas as pl
from jax.experimental.pallas import tpu as pltpu


def positional_encoding_kernel(x_ref, pe_ref, out_ref):
    # (tb, ts, E) + (1, ts, E) broadcast add — pure VPU elementwise work,
    # lane-dense output (block covers the full E axis).
    out_ref[...] = x_ref[...] + pe_ref[...]


def build_pe(d_model, max_len=5000):
    """Build the (1, max_len, d_model) sin/cos buffer exactly like the PyTorch module."""
    position = jnp.arange(max_len, dtype=jnp.float32)[:, None]               # (max_len, 1)
    div_term = jnp.exp(
        jnp.arange(0, d_model, 2, dtype=jnp.float32) * (-math.log(10000.0) / d_model)
    )                                                                         # (d_model//2,)
    ang = position * div_term                                                 # (max_len, d_model//2)
    pe = jnp.zeros((max_len, d_model), jnp.float32)
    pe = pe.at[:, 0::2].set(jnp.sin(ang))
    pe = pe.at[:, 1::2].set(jnp.cos(ang))
    return pe[None]                                                           # (1, max_len, d_model)


def _vmem_budget_bytes():
    """Generation-aware VMEM budget: physical capacity minus ~25% headroom."""
    phys = 64 << 20  # conservative fallback (v7x per-TensorCore VMEM)
    try:
        info = pltpu.get_tpu_info()
        phys = int(getattr(info, "vmem_capacity_bytes", phys))
    except Exception:
        pass
    return (phys * 3) // 4  # ≈48 MiB on v7x, ≈96 MiB on v5e/v6e


def _choose_tiles(B, S, E, itemsize, vmem_budget):
    """Pick (tb, ts) so blocks are ~1-4 MiB, (8,128)-aligned, and the pipeline's
    VMEM footprint (2x x-block + 2x out-block + 2x pe-block) fits the budget."""
    row_bytes = E * itemsize
    # Sublane packing: 8 rows for 4-byte, 16 for 2-byte, 32 for 1-byte dtypes.
    sub = 8 * max(1, 4 // max(1, itemsize))
    target = 4 << 20  # ~4 MiB blocks sit at the measured ~85% HBM-roofline sweet spot

    divisors_desc = [d for d in range(S, 0, -1) if S % d == 0]
    aligned = [d for d in divisors_desc if d % sub == 0]

    # Sequence tile: largest aligned divisor whose single-batch block fits the
    # target AND whose minimal (tb=1) pipeline footprint fits the VMEM budget.
    ts = None
    for d in aligned:
        if d * row_bytes <= target and 6 * d * row_bytes <= vmem_budget:
            ts = d
            break
    if ts is None:
        ts = aligned[-1] if aligned else S  # best effort (full S is also legal)

    # Batch tile: largest divisor of B keeping the block near target size and
    # the total (4*tb + 2) * ts * row_bytes pipeline footprint within budget.
    blk_cap = max(target, ts * row_bytes)
    tb = 1
    for d in range(B, 0, -1):
        if B % d:
            continue
        blk = d * ts * row_bytes
        if blk <= blk_cap and (4 * d + 2) * ts * row_bytes <= vmem_budget:
            tb = d
            break
    return tb, ts


def positional_encoding(x, pe, *, donate_x=False):
    B, S, E = x.shape
    # Equivalent to the module's `x + self.pe` broadcast (exact when S == max_len).
    # Pre-cast pe once so the kernel does no per-step dtype conversion.
    pe_s = pe[:, :S, :].astype(x.dtype)

    budget = _vmem_budget_bytes()
    tb, ts = _choose_tiles(B, S, E, x.dtype.itemsize, budget)
    # s is the OUTER grid axis so pe's block index is constant across the inner
    # batch steps (Pallas keeps it resident -> pe is fetched once per s tile).
    grid = (S // ts, B // tb)

    extra = {}
    if donate_x:
        # Reuse x's HBM buffer for the output when the caller donates it.
        extra["input_output_aliases"] = {0: 0}

    return pl.pallas_call(
        positional_encoding_kernel,
        out_shape=jax.ShapeDtypeStruct((B, S, E), x.dtype),
        grid_spec=pltpu.PrefetchScalarGridSpec(
            num_scalar_prefetch=0,
            grid=grid,
            in_specs=[
                pl.BlockSpec((tb, ts, E), lambda s, b: (b, s, 0)),  # x chunk
                pl.BlockSpec((1, ts, E), lambda s, b: (0, s, 0)),   # pe, resident over b
            ],
            out_specs=pl.BlockSpec((tb, ts, E), lambda s, b: (b, s, 0)),
        ),
        compiler_params=pltpu.CompilerParams(
            dimension_semantics=("parallel", "parallel"),  # shards across v7x's 2 TCs
            vmem_limit_bytes=budget,
        ),
        cost_estimate=pl.CostEstimate(
            flops=B * S * E,
            transcendentals=0,
            bytes_accessed=2 * B * S * E * x.dtype.itemsize + S * E * x.dtype.itemsize,
        ),
        **extra,
    )(x, pe_s)


if __name__ == "__main__":
    key = jax.random.PRNGKey(0)

    # Small shapes consistent with the module: batch=2, seq=8, d_model=128.
    B, S, D = 2, 8, 128
    x = jax.random.normal(key, (B, S, D), jnp.float32)

    # max_len == seq so `x + self.pe` broadcasts exactly like the PyTorch forward.
    pe = build_pe(D, max_len=S)

    # Pure-JAX reference (eval mode: dropout = identity), computed before the call.
    ref = x + pe

    out = jax.block_until_ready(positional_encoding(x, pe))

    if out.shape != ref.shape:
        raise AssertionError(f"shape mismatch: {out.shape} vs {ref.shape}")
    if not jnp.allclose(out, ref, atol=1e-6, rtol=1e-6):
        raise AssertionError(
            f"mismatch: max abs diff = {float(jnp.max(jnp.abs(out - ref)))}"
        )
    print("KERNEL_OK")
</pallas_src>

<mosaic_0001>
module attributes {stable_mosaic.version = 11 : i64} {
  func.func @positional_encoding_kernel(%arg0: i32, %arg1: i32, %arg2: memref<2x8x128xf32, #tpu.memory_space<vmem>>, %arg3: memref<1x8x128xf32, #tpu.memory_space<vmem>>, %arg4: memref<2x8x128xf32, #tpu.memory_space<vmem>>) attributes {dimension_semantics = [#tpu.dimension_semantics<parallel>, #tpu.dimension_semantics<parallel>], iteration_bounds = array<i64: 1, 1>, scalar_prefetch = 0 : i64, scratch_operands = 0 : i64, tpu.core_type = #tpu.core_type<tc>, window_params = [{transform_indices = @transform_0, window_bounds = array<i64: 2, 8, 128>}, {transform_indices = @transform_1, window_bounds = array<i64: 1, 8, 128>}, {transform_indices = @transform_2, window_bounds = array<i64: 2, 8, 128>}]} {
    %c0 = arith.constant 0 : index
    %c0_0 = arith.constant 0 : index
    %c0_1 = arith.constant 0 : index
    %0 = vector.load %arg2[%c0, %c0_0, %c0_1] : memref<2x8x128xf32, #tpu.memory_space<vmem>>, vector<2x8x128xf32>
    %c0_2 = arith.constant 0 : index
    %c0_3 = arith.constant 0 : index
    %c0_4 = arith.constant 0 : index
    %1 = vector.load %arg3[%c0_2, %c0_3, %c0_4] : memref<1x8x128xf32, #tpu.memory_space<vmem>>, vector<1x8x128xf32>
    %2 = vector.broadcast %1 : vector<1x8x128xf32> to vector<2x8x128xf32>
    %3 = arith.addf %0, %2 : vector<2x8x128xf32>
    %c0_5 = arith.constant 0 : index
    %c0_6 = arith.constant 0 : index
    %c0_7 = arith.constant 0 : index
    %4 = vector.load %arg4[%c0_5, %c0_6, %c0_7] : memref<2x8x128xf32, #tpu.memory_space<vmem>>, vector<2x8x128xf32>
    tpu.vector_store %arg4[%c0_5, %c0_6, %c0_7], %3 {strides = array<i32>} : memref<2x8x128xf32, #tpu.memory_space<vmem>>, vector<2x8x128xf32>,
    return
  }
  func.func @transform_0(%arg0: i32, %arg1: i32) -> (i32, i32, i32) {
    %c0_i32 = arith.constant 0 : i32
    %c0_i32_0 = arith.constant 0 : i32
    return %arg1, %arg0, %c0_i32 : i32, i32, i32
  }
  func.func @transform_1(%arg0: i32, %arg1: i32) -> (i32, i32, i32) {
    %c0_i32 = arith.constant 0 : i32
    %c0_i32_0 = arith.constant 0 : i32
    %c0_i32_1 = arith.constant 0 : i32
    return %c0_i32, %arg0, %c0_i32_0 : i32, i32, i32
  }
  func.func @transform_2(%arg0: i32, %arg1: i32) -> (i32, i32, i32) {
    %c0_i32 = arith.constant 0 : i32
    %c0_i32_0 = arith.constant 0 : i32
    return %arg1, %arg0, %c0_i32 : i32, i32, i32
  }
}

</mosaic_0001>

<llo_original>
// kernel: tpu_custom_call.1
$region0: #{tpu_custom_call.1}
  #allocation0 [shape = 'u32[]', space=smem, size = 0x4, offset = 0x4, fixed_abs, tag = 'smem constant byte address 0x4 - core index']
  #allocation1 [shape = 'u32[72,128]{1,0:T(1,128)}', space=vmem, size = 0x9000, scoped, tag = 'internal scratch']
  %s0 = inlined_call_operand.hbm [shape: f32[2,8,128], index: 0, kind: input, shape index: {}]
  %s1 = inlined_call_operand.hbm [shape: f32[1,8,128], index: 1, kind: input, shape index: {}]
  %s2 = inlined_call_operand.hbm [shape: f32[2,8,128], index: 2, kind: output, shape index: {}]
  %s3 = sld [smem:[#allocation0]]
  $region26: #{tpu_custom_call.1} parent=0
    _
  %s5 = ssub.s32 1, %s3
  %s6 = scalar_select 0, %s5, %s3
  $region1: #{tpu_custom_call.1} parent=0
    #allocation2 [shape = 'u8[8192]{0}', space=vmem, size = 0x2000, scoped, tag = 'input window, operand 0, single buffered']
    #allocation3 [shape = 's32[1]{0}', space=sflag, size = 0x4, scoped, tag = 'scoped memory for tpu_custom_call.1']
    #allocation4 [shape = 's32[1]{0}', space=sflag, size = 0x4, scoped, tag = 'scoped memory for tpu_custom_call.1']
    #allocation5 [shape = 'u8[4096]{0}', space=vmem, size = 0x1000, scoped, tag = 'input window, operand 1, single buffered']
    #allocation6 [shape = 's32[1]{0}', space=sflag, size = 0x4, scoped, tag = 'scoped memory for tpu_custom_call.1']
    #allocation7 [shape = 'u8[8192]{0}', space=vmem, size = 0x2000, scoped, tag = 'output window, operand 0, single buffered']
    %7 = vsyncpa [#allocation3], 0
    %8 = vsyncpa [#allocation6], 0
    %9 = vsyncpa [#allocation4], 0
    // Predicated region
    $region2: #{tpu_custom_call.1} parent=1 // pred_check
      _
    $region3: #{tpu_custom_call.1} parent=1 // pred_check_branch
      %11 = sbr.rel (0) target = $region5
    $region4: #{tpu_custom_call.1} parent=1 // pred_region
      %13 = vsyncadd [#allocation3], 0
      %s14 = sshll.u32 %s0, 4
      %s15 = int_to_ptr.hbm [resolvable:$true] %s14
      %s16 = sshll.u32 [#allocation2], 4
      %s17 = int_to_ptr.vmem [resolvable:$true] %s16
      %22 = dma.hbm_to_vmem [thread:$0]  %s15, 256, %s17, [#allocation3], 128, 128, 8
    $region5: #{tpu_custom_call.1} parent=1 // pred_fallthru
      _
    // Predicated region
    $region6: #{tpu_custom_call.1} parent=1 // pred_check
      _
    $region7: #{tpu_custom_call.1} parent=1 // pred_check_branch
      %24 = sbr.rel (0) target = $region9
    $region8: #{tpu_custom_call.1} parent=1 // pred_region
      %26 = vsyncadd [#allocation6], 0
      %s28 = sshll.u32 %s1, 4
      %s29 = int_to_ptr.hbm [resolvable:$true] %s28
      %s30 = sshll.u32 [#allocation5], 4
      %s31 = int_to_ptr.vmem [resolvable:$true] %s30
      %33 = dma.hbm_to_vmem [thread:$0]  %s29, 128, %s31, [#allocation6]
    $region9: #{tpu_custom_call.1} parent=1 // pred_fallthru
      _
    // Predicated region
    $region10: #{tpu_custom_call.1} parent=1 // pred_check
      _
    $region11: #{tpu_custom_call.1} parent=1 // pred_check_branch
      %35 = sbr.rel (0) target = $region13
    $region12: #{tpu_custom_call.1} parent=1 // pred_region
      %37 = dma.done [#allocation3], 256
    $region13: #{tpu_custom_call.1} parent=1 // pred_fallthru
      _
    // Predicated region
    $region14: #{tpu_custom_call.1} parent=1 // pred_check
      _
    $region15: #{tpu_custom_call.1} parent=1 // pred_check_branch
      %39 = sbr.rel (0) target = $region17
    $region16: #{tpu_custom_call.1} parent=1 // pred_region
      %41 = dma.done [#allocation6], 128
    $region17: #{tpu_custom_call.1} parent=1 // pred_fallthru
      _
    %v42 = vld [vmem:[#allocation2] sm:$0xff]
    %v43 = vld [vmem:[#allocation2 + $0x8] sm:$0xff]
    %v44 = vld [vmem:[#allocation5] sm:$0xff]
    %v45 = vadd.f32 %v42, %v44
    %v46 = vadd.f32 %v43, %v44
    %47 = vst [vmem:[#allocation7] sm:$0xff] %v45
    %48 = vst [vmem:[#allocation7 + $0x8] sm:$0xff] %v46
    // Predicated region
    $region18: #{tpu_custom_call.1} parent=1 // pred_check
      _
    $region19: #{tpu_custom_call.1} parent=1 // pred_check_branch
      %50 = sbr.rel (0) target = $region21
    $region20: #{tpu_custom_call.1} parent=1 // pred_region
      %52 = vsyncadd [#allocation4], 0
      %s53 = sshll.u32 [#allocation7], 4
      %s54 = int_to_ptr.vmem [resolvable:$true] %s53
      %s55 = sshll.u32 %s2, 4
      %s56 = int_to_ptr.hbm [resolvable:$true] %s55
      %61 = dma.vmem_to_hbm [thread:$0]  %s54, 256, %s56, [#allocation4], 128, 128, 8
    $region21: #{tpu_custom_call.1} parent=1 // pred_fallthru
      _
    // Predicated region
    $region22: #{tpu_custom_call.1} parent=1 // pred_check
      _
    $region23: #{tpu_custom_call.1} parent=1 // pred_check_branch
      %63 = sbr.rel (0) target = $region25
    $region24: #{tpu_custom_call.1} parent=1 // pred_region
      %65 = dma.done [#allocation4], 256
    $region25: #{tpu_custom_call.1} parent=1 // pred_fallthru
      _
    %66 = vsyncpa [#allocation3], 1
    %67 = vsyncpa [#allocation6], 1
    %68 = vsyncpa [#allocation4], 1

</llo_original>
